<compile_context>
chip_gen: v5e
topology: v5e:2x2
jax: 0.10.0
libtpu: 0.0.40
codegen_flags: <defaults>
</compile_context>

<pallas_src>
import math

import jax
import jax.numpy as jnp
from jax.experimental import pallas as pl
from jax.experimental.pallas import tpu as pltpu

_GELU_C = math.sqrt(2.0 / math.pi)
_GELU_C3 = _GELU_C * 0.044715


def _round_up(a, b):
    return (a + b - 1) // b * b


def _cdiv(a, b):
    return -(-a // b)


def gelu_new_jnp(x):
    # identical to the HF "gelu_new" used by GPT-2 (reference math)
    return 0.5 * x * (1.0 + jnp.tanh(_GELU_C * (x + 0.044715 * x ** 3)))


def gpt2_mlp_kernel(x_ref, wfc_ref, bfc_ref, wproj_ref, bproj_ref, o_ref, acc_ref):
    # x_ref:     (tm, D)  bf16      wfc_ref:   (D, tk) bf16    bfc_ref:   (1, tk) f32
    # wproj_ref: (tk, D)  bf16      bproj_ref: (1, D)  f32
    # o_ref:     (tm, D)            acc_ref:   (tm, D) f32 scratch (resident over k)
    k = pl.program_id(1)

    @pl.when(k == 0)
    def _init():
        # Fold the projection bias into the accumulator once per row tile.
        acc_ref[...] = jnp.broadcast_to(bproj_ref[...], acc_ref.shape).astype(jnp.float32)

    # c_fc on this NX tile: (tm, D) @ (D, tk) -- bf16 MXU operands, f32 accumulate.
    h = jnp.dot(x_ref[...], wfc_ref[...], preferred_element_type=jnp.float32)
    h = h + bfc_ref[...]

    # gelu_new with folded constants:
    #   c*(h + 0.044715*h^3) == h * (c + (c*0.044715) * h^2);  tanh -> EUP slot.
    inner = h * (_GELU_C + _GELU_C3 * (h * h))
    g = 0.5 * h * (1.0 + jnp.tanh(inner))

    # partial c_proj: (tm, tk) @ (tk, D), accumulate into the resident f32 acc.
    acc_ref[...] += jnp.dot(g.astype(jnp.bfloat16), wproj_ref[...],
                            preferred_element_type=jnp.float32)

    @pl.when(k == pl.num_programs(1) - 1)
    def _finalize():
        # dropout (eval) == identity
        o_ref[...] = acc_ref[...].astype(o_ref.dtype)


def _pick_tm(M, tm_max):
    """Row tile: >= 2 tiles when possible (both v7x TCs), padding split evenly."""
    Mp8 = _round_up(M, 8)
    if Mp8 <= 8:
        return 8
    tiles = max(2, _cdiv(Mp8, tm_max))
    return max(8, _round_up(_cdiv(Mp8, tiles), 8))


def _pick_tk(NX, tk_max):
    """NX tile: lane-aligned, aim for few (1-3) reduction steps."""
    NXp = _round_up(NX, 128)
    if NXp <= tk_max:
        return NXp
    steps = _cdiv(NXp, tk_max)
    return _round_up(_cdiv(NXp, steps), 128)


def _vmem_bytes(tm, tk, D, wbuf):
    return (2 * tm * D * 2            # x double buffer (bf16)
            + wbuf * D * tk * 2       # W_fc buffers (bf16)
            + wbuf * tk * D * 2       # W_proj buffers (bf16)
            + 2 * tm * D * 2          # out double buffer (bf16)
            + tm * D * 4              # resident f32 accumulator scratch
            + 4 * tm * tk * 4         # compiler-materialized (tm, tk) gelu intermediates
            + wbuf * (tk + D) * 4)    # bias buffers (f32)


def _weight_spec(block_shape, index_map, wbuf):
    # Deeper weight pipelining hides the k-reset bubble at row-tile boundaries.
    # Built defensively: fall back to default double-buffering if `pipeline_mode`
    # is not supported by this jax version.
    if wbuf != 2:
        try:
            return pl.BlockSpec(block_shape, index_map, pipeline_mode=pl.Buffered(wbuf))
        except TypeError:
            pass
    return pl.BlockSpec(block_shape, index_map)


def gpt2_mlp(x, w_fc, b_fc, w_proj, b_proj, *,
             tm_max=1024, tk_max=1024, out_dtype=jnp.bfloat16):
    """x: (batch, seq, d_model) -> (batch, seq, d_model) in `out_dtype` (bf16 default)."""
    B, S, D = x.shape
    NX = w_fc.shape[1]
    M = B * S

    # --- tile selection (MXU-bound target: tm ~ 768-1024 FLOP/byte on streamed weights) ---
    tm = _pick_tm(M, tm_max)
    tk = _pick_tk(NX, tk_max)

    # Shrink tiles until they fit a conservative 56 MiB budget (valid even on v7x's
    # 64 MiB per-TC VMEM); real GPT-2 sizes stay well under this.
    budget = 56 << 20
    while _vmem_bytes(tm, tk, D, 3) > budget and tk > 256:
        tk = max(256, _round_up(tk // 2, 128))
    while _vmem_bytes(tm, tk, D, 3) > budget and tm > 256:
        tm = max(256, _round_up(tm // 2, 8))

    Mp = _round_up(M, tm)
    NXp = _round_up(NX, tk)
    grid = (Mp // tm, NXp // tk)

    # Triple-buffer the weights only when there are multiple row tiles AND multiple
    # k tiles (otherwise the extra buffer is pure VMEM waste).
    wbuf = 3 if (grid[0] >= 2 and grid[1] >= 2) else 2

    vmem_limit = int(min(64 << 20, max(32 << 20, _vmem_bytes(tm, tk, D, wbuf) + (8 << 20))))

    # --- padding (mathematically inert: gelu-of-bias on padded rows is sliced off;
    #     zero-padded ffn columns contribute nothing since the matching W_proj rows are 0) ---
    x2d = x.reshape(M, D)
    if Mp != M:
        x2d = jnp.pad(x2d, ((0, Mp - M), (0, 0)))

    wfc, bfc, wproj = w_fc, b_fc, w_proj
    if NXp != NX:
        wfc = jnp.pad(wfc, ((0, 0), (0, NXp - NX)))
        bfc = jnp.pad(bfc, ((0, NXp - NX),))
        wproj = jnp.pad(wproj, ((0, NXp - NX), (0, 0)))

    # bf16 MXU operands; f32 accumulation inside the kernel. Biases stay f32.
    x2d = x2d.astype(jnp.bfloat16)
    wfc = wfc.astype(jnp.bfloat16)
    wproj = wproj.astype(jnp.bfloat16)
    bfc2 = bfc.reshape(1, NXp).astype(jnp.float32)
    bproj2 = b_proj.reshape(1, D).astype(jnp.float32)

    out_itemsize = jnp.dtype(out_dtype).itemsize
    cost = pl.CostEstimate(
        flops=4 * M * D * NX,                    # two matmuls
        transcendentals=M * NX,                  # one tanh per ffn element
        bytes_accessed=(Mp * D * 2               # x in (bf16)
                        + grid[0] * (D * NXp + NXp * D) * 2   # weights re-streamed per row tile
                        + (NXp + D) * 4          # biases
                        + Mp * D * out_itemsize))  # out

    out2d = pl.pallas_call(
        gpt2_mlp_kernel,
        out_shape=jax.ShapeDtypeStruct((Mp, D), out_dtype),
        grid_spec=pltpu.PrefetchScalarGridSpec(
            num_scalar_prefetch=0,
            grid=grid,
            in_specs=[
                pl.BlockSpec((tm, D), lambda i, k: (i, 0)),          # x row tile
                _weight_spec((D, tk), lambda i, k: (0, k), wbuf),    # W_fc  k-tile
                pl.BlockSpec((1, tk), lambda i, k: (0, k)),          # b_fc  k-tile
                _weight_spec((tk, D), lambda i, k: (k, 0), wbuf),    # W_proj k-tile
                pl.BlockSpec((1, D), lambda i, k: (0, 0)),           # b_proj (invariant)
            ],
            out_specs=pl.BlockSpec((tm, D), lambda i, k: (i, 0)),
            scratch_shapes=[pltpu.VMEM((tm, D), jnp.float32)],       # resident f32 accumulator
        ),
        compiler_params=pltpu.CompilerParams(
            # Row tiles are independent (shard across v7x's 2 TCs); NX axis is the
            # sequential reduction feeding the accumulator.
            dimension_semantics=("parallel", "arbitrary"),
            vmem_limit_bytes=vmem_limit),
        cost_estimate=cost,
    )(x2d, wfc, bfc2, wproj, bproj2)

    return out2d[:M].reshape(B, S, D)


if __name__ == "__main__":
    # small GPT2-MLP config (lane-aligned): d_model=128, nx = 4*d_model = 512
    batch, seq, d_model = 2, 8, 128
    nx = 4 * d_model

    key = jax.random.PRNGKey(0)
    kx, kfc, kproj = jax.random.split(key, 3)

    x = jax.random.normal(kx, (batch, seq, d_model), dtype=jnp.float32)
    # Conv1D init: normal(std=0.02) weights, zero bias
    w_fc = 0.02 * jax.random.normal(kfc, (d_model, nx), dtype=jnp.float32)
    b_fc = jnp.zeros((nx,), dtype=jnp.float32)
    w_proj = 0.02 * jax.random.normal(kproj, (nx, d_model), dtype=jnp.float32)
    b_proj = jnp.zeros((d_model,), dtype=jnp.float32)

    out = gpt2_mlp(x, w_fc, b_fc, w_proj, b_proj)
    out = jax.block_until_ready(out)

    # reference check in plain JAX (f32 math); bf16 MXU operands / bf16 output -> loosened tolerance
    h_ref = gelu_new_jnp(x.reshape(-1, d_model) @ w_fc + b_fc)
    ref = (h_ref @ w_proj + b_proj).reshape(batch, seq, d_model)
    assert jnp.allclose(out.astype(jnp.float32), ref, atol=2e-2, rtol=2e-2), "mismatch vs reference"

    print("KERNEL_OK")
</pallas_src>

<mosaic_0001>
module attributes {stable_mosaic.version = 11 : i64} {
  func.func @gpt2_mlp_kernel(%arg0: i32, %arg1: i32, %arg2: memref<8x128xbf16, #tpu.memory_space<vmem>>, %arg3: memref<128x512xbf16, #tpu.memory_space<vmem>>, %arg4: memref<1x512xf32, #tpu.memory_space<vmem>>, %arg5: memref<512x128xbf16, #tpu.memory_space<vmem>>, %arg6: memref<1x128xf32, #tpu.memory_space<vmem>>, %arg7: memref<8x128xbf16, #tpu.memory_space<vmem>>, %arg8: memref<8x128xf32, #tpu.memory_space<vmem>>) attributes {dimension_semantics = [#tpu.dimension_semantics<parallel>, #tpu.dimension_semantics<arbitrary>], iteration_bounds = array<i64: 2, 1>, scalar_prefetch = 0 : i64, scratch_operands = 1 : i64, tpu.core_type = #tpu.core_type<tc>, window_params = [{transform_indices = @transform_0, window_bounds = array<i64: 8, 128>}, {transform_indices = @transform_1, window_bounds = array<i64: 128, 512>}, {transform_indices = @transform_2, window_bounds = array<i64: 1, 512>}, {transform_indices = @transform_3, window_bounds = array<i64: 512, 128>}, {pipeline_mode = #tpu.pipeline_mode<synchronous>, transform_indices = @transform_4, window_bounds = array<i64: 1, 128>}, {transform_indices = @transform_5, window_bounds = array<i64: 8, 128>}]} {
    %c0_i32 = arith.constant 0 : i32
    %0 = arith.cmpi eq, %arg1, %c0_i32 : i32
    %1 = arith.extui %0 : i1 to i32
    %c0_i32_0 = arith.constant 0 : i32
    %2 = arith.cmpi ne, %1, %c0_i32_0 : i32
    scf.if %2 {
      %c0_19 = arith.constant 0 : index
      %c0_20 = arith.constant 0 : index
      %30 = vector.load %arg6[%c0_19, %c0_20] : memref<1x128xf32, #tpu.memory_space<vmem>>, vector<1x128xf32>
      %31 = vector.shape_cast %30 : vector<1x128xf32> to vector<1x128xf32>
      %32 = vector.broadcast %31 : vector<1x128xf32> to vector<8x128xf32>
      %c0_21 = arith.constant 0 : index
      %c0_22 = arith.constant 0 : index
      %33 = vector.load %arg8[%c0_21, %c0_22] : memref<8x128xf32, #tpu.memory_space<vmem>>, vector<8x128xf32>
      tpu.vector_store %arg8[%c0_21, %c0_22], %32 {strides = array<i32>} : memref<8x128xf32, #tpu.memory_space<vmem>>, vector<8x128xf32>,
    } else {
    }
    %c0 = arith.constant 0 : index
    %c0_1 = arith.constant 0 : index
    %3 = vector.load %arg2[%c0, %c0_1] : memref<8x128xbf16, #tpu.memory_space<vmem>>, vector<8x128xbf16>
    %c0_2 = arith.constant 0 : index
    %c0_3 = arith.constant 0 : index
    %4 = vector.load %arg3[%c0_2, %c0_3] : memref<128x512xbf16, #tpu.memory_space<vmem>>, vector<128x512xbf16>
    %cst = arith.constant dense<0.000000e+00> : vector<8x512xf32>
    %5 = tpu.matmul %3, %4, %cst {dimension_numbers = #tpu.dot_dimension_numbers<[1], [0], [0], [1], [0, 0, 1, 1], [], []>} : vector<8x128xbf16>, vector<128x512xbf16>, vector<8x512xf32> -> vector<8x512xf32>
    %c0_4 = arith.constant 0 : index
    %c0_5 = arith.constant 0 : index
    %6 = vector.load %arg4[%c0_4, %c0_5] : memref<1x512xf32, #tpu.memory_space<vmem>>, vector<1x512xf32>
    %7 = vector.broadcast %6 : vector<1x512xf32> to vector<8x512xf32>
    %8 = arith.addf %5, %7 : vector<8x512xf32>
    %9 = arith.mulf %8, %8 : vector<8x512xf32>
    %cst_6 = arith.constant 0.0356774069 : f32
    %10 = vector.broadcast %cst_6 : f32 to vector<8x512xf32>
    %11 = arith.mulf %10, %9 : vector<8x512xf32>
    %cst_7 = arith.constant 0.797884583 : f32
    %12 = vector.broadcast %cst_7 : f32 to vector<8x512xf32>
    %13 = arith.addf %12, %11 : vector<8x512xf32>
    %14 = arith.mulf %8, %13 : vector<8x512xf32>
    %cst_8 = arith.constant 5.000000e-01 : f32
    %15 = vector.broadcast %cst_8 : f32 to vector<8x512xf32>
    %16 = arith.mulf %15, %8 : vector<8x512xf32>
    %17 = math.tanh %14 : vector<8x512xf32>
    %cst_9 = arith.constant 1.000000e+00 : f32
    %18 = vector.broadcast %cst_9 : f32 to vector<8x512xf32>
    %19 = arith.addf %18, %17 : vector<8x512xf32>
    %20 = arith.mulf %16, %19 : vector<8x512xf32>
    %c0_10 = arith.constant 0 : index
    %c0_11 = arith.constant 0 : index
    %21 = vector.load %arg8[%c0_10, %c0_11] : memref<8x128xf32, #tpu.memory_space<vmem>>, vector<8x128xf32>
    %22 = arith.truncf %20 : vector<8x512xf32> to vector<8x512xbf16>
    %c0_12 = arith.constant 0 : index
    %c0_13 = arith.constant 0 : index
    %23 = vector.load %arg5[%c0_12, %c0_13] : memref<512x128xbf16, #tpu.memory_space<vmem>>, vector<512x128xbf16>
    %cst_14 = arith.constant dense<0.000000e+00> : vector<8x128xf32>
    %24 = tpu.matmul %22, %23, %cst_14 {dimension_numbers = #tpu.dot_dimension_numbers<[1], [0], [0], [1], [0, 0, 1, 1], [], []>} : vector<8x512xbf16>, vector<512x128xbf16>, vector<8x128xf32> -> vector<8x128xf32>
    %25 = arith.addf %21, %24 : vector<8x128xf32>
    %c0_15 = arith.constant 0 : index
    %c0_16 = arith.constant 0 : index
    %26 = vector.load %arg8[%c0_15, %c0_16] : memref<8x128xf32, #tpu.memory_space<vmem>>, vector<8x128xf32>
    tpu.vector_store %arg8[%c0_15, %c0_16], %25 {strides = array<i32>} : memref<8x128xf32, #tpu.memory_space<vmem>>, vector<8x128xf32>,
    %c0_i32_17 = arith.constant 0 : i32
    %27 = arith.cmpi eq, %arg1, %c0_i32_17 : i32
    %28 = arith.extui %27 : i1 to i32
    %c0_i32_18 = arith.constant 0 : i32
    %29 = arith.cmpi ne, %28, %c0_i32_18 : i32
    scf.if %29 {
      %c0_19 = arith.constant 0 : index
      %c0_20 = arith.constant 0 : index
      %30 = vector.load %arg8[%c0_19, %c0_20] : memref<8x128xf32, #tpu.memory_space<vmem>>, vector<8x128xf32>
      %31 = arith.truncf %30 : vector<8x128xf32> to vector<8x128xbf16>
      %c0_21 = arith.constant 0 : index
      %c0_22 = arith.constant 0 : index
      %32 = vector.load %arg7[%c0_21, %c0_22] : memref<8x128xbf16, #tpu.memory_space<vmem>>, vector<8x128xbf16>
      tpu.vector_store %arg7[%c0_21, %c0_22], %31 {strides = array<i32>} : memref<8x128xbf16, #tpu.memory_space<vmem>>, vector<8x128xbf16>,
    } else {
    }
    return
  }
  func.func @transform_0(%arg0: i32, %arg1: i32) -> (i32, i32) {
    %c0_i32 = arith.constant 0 : i32
    %c0_i32_0 = arith.constant 0 : i32
    return %arg0, %c0_i32 : i32, i32
  }
  func.func @transform_1(%arg0: i32, %arg1: i32) -> (i32, i32) {
    %c0_i32 = arith.constant 0 : i32
    %c0_i32_0 = arith.constant 0 : i32
    return %c0_i32, %arg1 : i32, i32
  }
  func.func @transform_2(%arg0: i32, %arg1: i32) -> (i32, i32) {
    %c0_i32 = arith.constant 0 : i32
    %c0_i32_0 = arith.constant 0 : i32
    return %c0_i32, %arg1 : i32, i32
  }
  func.func @transform_3(%arg0: i32, %arg1: i32) -> (i32, i32) {
    %c0_i32 = arith.constant 0 : i32
    %c0_i32_0 = arith.constant 0 : i32
    return %arg1, %c0_i32 : i32, i32
  }
  func.func @transform_4(%arg0: i32, %arg1: i32) -> (i32, i32) {
    %c0_i32 = arith.constant 0 : i32
    %c0_i32_0 = arith.constant 0 : i32
    %c0_i32_1 = arith.constant 0 : i32
    return %c0_i32, %c0_i32_0 : i32, i32
  }
  func.func @transform_5(%arg0: i32, %arg1: i32) -> (i32, i32) {
    %c0_i32 = arith.constant 0 : i32
    %c0_i32_0 = arith.constant 0 : i32
    return %arg0, %c0_i32 : i32, i32
  }
}

</mosaic_0001>

<llo_original>
// kernel: tpu_custom_call.1
$region0: #{tpu_custom_call.1}
  #allocation0 [shape = 'u32[]', space=smem, size = 0x4, offset = 0x4, fixed_abs, tag = 'smem constant byte address 0x4 - core index']
  #allocation1 [shape = 'u32[72,128]{1,0:T(1,128)}', space=vmem, size = 0x9000, scoped, tag = 'internal scratch']
  #allocation2 [shape = 'f32[8,128]{1,0:T(8,128)}', space=vmem, size = 0x1000, scoped, tag = 'scratch operand']
  %s0 = inlined_call_operand.hbm [shape: bf16[16,128], index: 0, kind: input, shape index: {}]
  %s1 = inlined_call_operand.hbm [shape: bf16[128,512], index: 1, kind: input, shape index: {}]
  %s2 = inlined_call_operand.hbm [shape: f32[1,512], index: 2, kind: input, shape index: {}]
  %s3 = inlined_call_operand.hbm [shape: bf16[512,128], index: 3, kind: input, shape index: {}]
  %s4 = inlined_call_operand.vmem [shape: f32[1,128], index: 4, kind: input, shape index: {}]
  %s5 = inlined_call_operand.hbm [shape: bf16[16,128], index: 5, kind: output, shape index: {}]
  %s6 = sld [smem:[#allocation0]]
  $region77: #{tpu_custom_call.1} parent=0
    _
  %s8 = ssub.s32 1, %s6
  %s9 = scalar_select 0, %s8, %s6
  $region1: #{tpu_custom_call.1} parent=0
    #allocation3 [shape = 'u8[4096]{0}', space=vmem, size = 0x1000, scoped, tag = 'input window, operand 0']
    #allocation4 [shape = 's32[2]{0}', space=sflag, size = 0x8, scoped, tag = 'scoped memory for tpu_custom_call.1']
    #allocation5 [shape = 's32[2]{0}', space=sflag, size = 0x8, scoped, tag = 'scoped memory for tpu_custom_call.1']
    #allocation6 [shape = 'u8[131072]{0}', space=vmem, size = 0x20000, scoped, tag = 'input window, operand 1, single buffered']
    #allocation7 [shape = 's32[1]{0}', space=sflag, size = 0x4, scoped, tag = 'scoped memory for tpu_custom_call.1']
    #allocation8 [shape = 'u8[2048]{0}', space=vmem, size = 0x800, scoped, tag = 'input window, operand 2, single buffered']
    #allocation9 [shape = 'u8[131072]{0}', space=vmem, size = 0x20000, scoped, tag = 'input window, operand 3, single buffered']
    #allocation10 [shape = 's32[1]{0}', space=sflag, size = 0x4, scoped, tag = 'scoped memory for tpu_custom_call.1']
    #allocation11 [shape = 'u8[4096]{0}', space=vmem, size = 0x1000, scoped, tag = 'output window, operand 0']
    %10 = vsyncpa [#allocation4], 0
    %s11 = scalar_lea.sflag [#allocation4], 1
    %12 = vsyncpa %s11, 0
    %13 = vsyncpa [#allocation7], 0
    %14 = vsyncpa [#allocation10], 0
    %15 = vsyncpa [#allocation5], 0
    %s16 = scalar_lea.sflag [#allocation5], 1
    %17 = vsyncpa %s16, 0
    loop: start=0, step=1, limit=4
    $region2: #{tpu_custom_call.1} parent=1 // loop_pre_header
      _
    $region3: #{tpu_custom_call.1} parent=1 // loop_header
      %s19 = sphi 0, %s23
      %p20 = scmp.ge.s32.totalorder %s19, 4
      %s26 = sphi 0, %s38
      %s27 = sphi 0, %s34
      %s28 = sphi 0, %s26
      %s29 = sphi 0, %s27
      %s30 = sphi 0, %s28
      %s31 = sphi 0, %s29
      %s41 = sphi 0, %s43
      %s44 = sphi 0, %s41
      %s45 = sphi 0, %s44
      %s61 = sphi 0, %s45
      %s67 = sphi 0, %s69
      %s70 = sphi 0, %s67
      %s71 = sphi 0, %s70
      %s87 = sphi 0, %s71
      %s93 = sphi 0, %s95
      %s96 = sphi 0, %s93
      %s97 = sphi 0, %s96
      %s113 = sphi 0, %s97
      %s119 = sphi 0, %s121
      %s122 = sphi 0, %s119
      %s123 = sphi 0, %s122
      %s139 = sphi 0, %s123
      %s143 = sphi 0, %s143
      %s145 = sphi 0, %s143
      %s146 = sphi 0, %s145
      %s160 = sphi 0, %s146
      %s166 = sphi 0, %s168
      %s169 = sphi 0, %s166
      %s170 = sphi 0, %s169
      %s186 = sphi 0, %s170
    $region4: #{tpu_custom_call.1} parent=1 // loop_header_branch
      %22 = sbr.rel (%p20) target = $region8
    $region5: #{tpu_custom_call.1} parent=1 // loop_body
      %s24 = ssub.s32 %s19, 1
      %s25 = ssub.s32 %s19, 2
      %s32 = sadd.s32 1, %s27
      %p33 = scmp.ge.s32.totalorder %s32, 1
      %s34 = scalar_select %p33, 0, %s32
      %s35 = sadd.s32 1, %s26
      %s36 = scalar_select %p33, %s35, %s26
      %p37 = scmp.ge.s32.totalorder %s36, 2
      %s38 = scalar_select %p37, 0, %s36
      %s39 = ssub.s32 %s26, %s38
      %p40 = scmp.eq.s32.totalorder %s39, 0
      %s42 = sadd.s32 %s41, 1
      %s43 = scalar_select %p40, %s41, %s42
      %p46 = pneg %p40
      %p47 = scmp.eq.s32.totalorder %s19, 1
      %p48 = por %p46, %p47
      %p49 = scmp.ne.s32.totalorder %s41, %s44
      %p50 = scmp.eq.s32.totalorder %s19, 0
      %p51 = por %p49, %p50
      %p52 = scmp.ne.s32.totalorder %s41, %s44
      %p53 = scmp.eq.s32.totalorder %s24, 1
      %p54 = por %p52, %p53
      %p55 = scmp.ne.s32.totalorder %s44, %s45
      %p56 = scmp.eq.s32.totalorder %s24, 0
      %p57 = por %p55, %p56
      %p58 = scmp.ne.s32.totalorder %s44, %s45
      %p59 = scmp.eq.s32.totalorder %s25, 1
      %p60 = por %p58, %p59
      %p62 = scmp.ne.s32.totalorder %s45, %s61
      %p63 = scmp.eq.s32.totalorder %s25, 0
      %p64 = por %p62, %p63
      %s65 = ssub.s32 %s27, %s34
      %p66 = scmp.eq.s32.totalorder %s65, 0
      %s68 = sadd.s32 %s67, 1
      %s69 = scalar_select %p66, %s67, %s68
      %p72 = pneg %p66
      %p73 = scmp.eq.s32.totalorder %s19, 1
      %p74 = por %p72, %p73
      %p75 = scmp.ne.s32.totalorder %s67, %s70
      %p76 = scmp.eq.s32.totalorder %s19, 0
      %p77 = por %p75, %p76
      %p78 = scmp.ne.s32.totalorder %s67, %s70
      %p79 = scmp.eq.s32.totalorder %s24, 1
      %p80 = por %p78, %p79
      %p81 = scmp.ne.s32.totalorder %s70, %s71
      %p82 = scmp.eq.s32.totalorder %s24, 0
      %p83 = por %p81, %p82
      %p84 = scmp.ne.s32.totalorder %s70, %s71
      %p85 = scmp.eq.s32.totalorder %s25, 1
      %p86 = por %p84, %p85
      %p88 = scmp.ne.s32.totalorder %s71, %s87
      %p89 = scmp.eq.s32.totalorder %s25, 0
      %p90 = por %p88, %p89
      %s91 = ssub.s32 %s27, %s34
      %p92 = scmp.eq.s32.totalorder %s91, 0
      %s94 = sadd.s32 %s93, 1
      %s95 = scalar_select %p92, %s93, %s94
      %p98 = pneg %p92
      %p99 = scmp.eq.s32.totalorder %s19, 1
      %p100 = por %p98, %p99
      %p101 = scmp.ne.s32.totalorder %s93, %s96
      %p102 = scmp.eq.s32.totalorder %s19, 0
      %p103 = por %p101, %p102
      %p104 = scmp.ne.s32.totalorder %s93, %s96
      %p105 = scmp.eq.s32.totalorder %s24, 1
      %p106 = por %p104, %p105
      %p107 = scmp.ne.s32.totalorder %s96, %s97
      %p108 = scmp.eq.s32.totalorder %s24, 0
      %p109 = por %p107, %p108
      %p110 = scmp.ne.s32.totalorder %s96, %s97
      %p111 = scmp.eq.s32.totalorder %s25, 1
      %p112 = por %p110, %p111
      %p114 = scmp.ne.s32.totalorder %s97, %s113
      %p115 = scmp.eq.s32.totalorder %s25, 0
      %p116 = por %p114, %p115
      %s117 = ssub.s32 %s27, %s34
      %p118 = scmp.eq.s32.totalorder %s117, 0
      %s120 = sadd.s32 %s119, 1
      %s121 = scalar_select %p118, %s119, %s120
      %p124 = pneg %p118
      %p125 = scmp.eq.s32.totalorder %s19, 1
      %p126 = por %p124, %p125
      %p127 = scmp.ne.s32.totalorder %s119, %s122
      %p128 = scmp.eq.s32.totalorder %s19, 0
      %p129 = por %p127, %p128
      %p130 = scmp.ne.s32.totalorder %s119, %s122
      %p131 = scmp.eq.s32.totalorder %s24, 1
      %p132 = por %p130, %p131
      %p133 = scmp.ne.s32.totalorder %s122, %s123
      %p134 = scmp.eq.s32.totalorder %s24, 0
      %p135 = por %p133, %p134
      %p136 = scmp.ne.s32.totalorder %s122, %s123
      %p137 = scmp.eq.s32.totalorder %s25, 1
      %p138 = por %p136, %p137
      %p140 = scmp.ne.s32.totalorder %s123, %s139
      %p141 = scmp.eq.s32.totalorder %s25, 0
      %p142 = por %p140, %p141
      %s144 = sadd.s32 %s143, 1
      %p147 = scmp.eq.s32.totalorder %s19, 1
      %p148 = scmp.ne.s32.totalorder %s143, %s145
      %p149 = scmp.eq.s32.totalorder %s19, 0
      %p150 = por %p148, %p149
      %p151 = scmp.ne.s32.totalorder %s143, %s145
      %p152 = scmp.eq.s32.totalorder %s24, 1
      %p153 = por %p151, %p152
      %p154 = scmp.ne.s32.totalorder %s145, %s146
      %p155 = scmp.eq.s32.totalorder %s24, 0
      %p156 = por %p154, %p155
      %p157 = scmp.ne.s32.totalorder %s145, %s146
      %p158 = scmp.eq.s32.totalorder %s25, 1
      %p159 = por %p157, %p158
      %p161 = scmp.ne.s32.totalorder %s146, %s160
      %p162 = scmp.eq.s32.totalorder %s25, 0
      %p163 = por %p161, %p162
      %s164 = ssub.s32 %s26, %s38
      %p165 = scmp.eq.s32.totalorder %s164, 0
      %s167 = sadd.s32 %s166, 1
      %s168 = scalar_select %p165, %s166, %s167
      %p171 = pneg %p165
      %p172 = scmp.eq.s32.totalorder %s19, 1
      %p173 = por %p171, %p172
      %p174 = scmp.ne.s32.totalorder %s166, %s169
      %p175 = scmp.eq.s32.totalorder %s19, 0
      %p176 = por %p174, %p175
      %p177 = scmp.ne.s32.totalorder %s166, %s169
      %p178 = scmp.eq.s32.totalorder %s24, 1
      %p179 = por %p177, %p178
      %p180 = scmp.ne.s32.totalorder %s169, %s170
      %p181 = scmp.eq.s32.totalorder %s24, 0
      %p182 = por %p180, %p181
      %p183 = scmp.ne.s32.totalorder %s169, %s170
      %p184 = scmp.eq.s32.totalorder %s25, 1
      %p185 = por %p183, %p184
      %p187 = scmp.ne.s32.totalorder %s170, %s186
      %p188 = scmp.eq.s32.totalorder %s25, 0
      %p189 = por %p187, %p188
      %p190 = scmp.le.s32.totalorder 1, %s19
      %p191 = scmp.lt.s32.totalorder %s19, 3
      %p192 = pnand %p190, %p191
      %p193 = pneg %p192
      // Predicated region
      $region9: #{tpu_custom_call.1} parent=5 // pred_check
        _
      $region10: #{tpu_custom_call.1} parent=5 // pred_check_branch
        %195 = sbr.rel (%p192) target = $region12
      $region11: #{tpu_custom_call.1} parent=5 // pred_region
        %s196 = ssub.s32 %s19, 1
        // Predicated region
        $region13: #{tpu_custom_call.1} parent=11 // pred_check
          %p197 = pneg %p83
        $region14: #{tpu_custom_call.1} parent=11 // pred_check_branch
          %199 = sbr.rel (%p197) target = $region16
        $region15: #{tpu_custom_call.1} parent=11 // pred_region
          %s200 = smul.u32 4, %s29
          %202 = vsyncadd [#allocation7], 0
          %s203 = smul.addr %s200, 4
          %s204 = scalar_lea.hbm %s1, %s203
          %s205 = sshll.u32 %s204, 4
          %s206 = int_to_ptr.hbm [resolvable:$true] %s205
          %s207 = sshll.u32 [#allocation6], 4
          %s208 = int_to_ptr.vmem [resolvable:$true] %s207
          %213 = dma.hbm_to_vmem [thread:$0]  %s206, 4096, %s208, [#allocation7], 256, 256, 16
        $region16: #{tpu_custom_call.1} parent=11 // pred_fallthru
          _
        // Predicated region
        $region17: #{tpu_custom_call.1} parent=11 // pred_check
          %p214 = pneg %p109
        $region18: #{tpu_custom_call.1} parent=11 // pred_check_branch
          %216 = sbr.rel (%p214) target = $region20
        $region19: #{tpu_custom_call.1} parent=11 // pred_region
          %s217 = smul.u32 4, %s29
          %219 = vsyncadd [#allocation7], 0
          %s220 = scalar_lea.hbm %s2, %s217
          %s222 = sshll.u32 %s220, 4
          %s223 = int_to_ptr.hbm [resolvable:$true] %s222
          %s224 = sshll.u32 [#allocation8], 4
          %s225 = int_to_ptr.vmem [resolvable:$true] %s224
          %227 = dma.hbm_to_vmem [thread:$0]  %s223, 64, %s225, [#allocation7]
        $region20: #{tpu_custom_call.1} parent=11 // pred_fallthru
          _
        // Predicated region
        $region21: #{tpu_custom_call.1} parent=11 // pred_check
          %p228 = pneg %p135
        $region22: #{tpu_custom_call.1} parent=11 // pred_check_branch
          %230 = sbr.rel (%p228) target = $region24
        $region23: #{tpu_custom_call.1} parent=11 // pred_region
          %s231 = smul.u32 64, %s29
          %233 = vsyncadd [#allocation10], 0
          %s234 = smul.addr %s231, 4
          %s235 = scalar_lea.hbm %s3, %s234
          %s236 = sshll.u32 %s235, 4
          %s237 = int_to_ptr.hbm [resolvable:$true] %s236
          %s238 = sshll.u32 [#allocation9], 4
          %s239 = int_to_ptr.vmem [resolvable:$true] %s238
          %244 = dma.hbm_to_vmem [thread:$0]  %s237, 4096, %s239, [#allocation10], 64, 64, 4
        $region24: #{tpu_custom_call.1} parent=11 // pred_fallthru
          _
        // Predicated region
        $region25: #{tpu_custom_call.1} parent=11 // pred_check
          %p245 = pneg %p156
        $region26: #{tpu_custom_call.1} parent=11 // pred_check_branch
          %247 = sbr.rel (%p245) target = $region28
        $region27: #{tpu_custom_call.1} parent=11 // pred_region
          _
        $region28: #{tpu_custom_call.1} parent=11 // pred_fallthru
          _
      $region12: #{tpu_custom_call.1} parent=5 // pred_fallthru
        _
      %p248 = scmp.lt.s32.totalorder %s19, 2
      // Predicated region
      $region29: #{tpu_custom_call.1} parent=5 // pred_check
        %p249 = pneg %p248
      $region30: #{tpu_custom_call.1} parent=5 // pred_check_branch
        %251 = sbr.rel (%p249) target = $region32
      $region31: #{tpu_custom_call.1} parent=5 // pred_region
        // Predicated region
        $region33: #{tpu_custom_call.1} parent=31 // pred_check
          %p252 = pneg %p51
        $region34: #{tpu_custom_call.1} parent=31 // pred_check_branch
          %254 = sbr.rel (%p252) target = $region36
        $region35: #{tpu_custom_call.1} parent=31 // pred_region
          %s255 = sand.u32 %s41, 1
          %s256 = scalar_lea.sflag [#allocation4], %s255
          %s257 = sand.u32 %s41, 1
          %s258 = smul.addr %s257, 4
          %s259 = scalar_lea.vmem [#allocation3], %s258
          %261 = vsyncadd %s256, 0
          %s262 = smul.addr %s26, 4
          %s263 = scalar_lea.hbm %s0, %s262
          %s265 = sshll.u32 %s263, 4
          %s266 = int_to_ptr.hbm [resolvable:$true] %s265
          %s267 = sshll.u32 %s259, 4
          %s268 = int_to_ptr.vmem [resolvable:$true] %s267
          %270 = dma.hbm_to_vmem [thread:$0]  %s266, 64, %s268, %s256
        $region36: #{tpu_custom_call.1} parent=31 // pred_fallthru
          _
      $region32: #{tpu_custom_call.1} parent=5 // pred_fallthru
        _
      %p271 = scmp.le.s32.totalorder 1, %s19
      %p272 = scmp.lt.s32.totalorder %s19, 3
      %p273 = pnand %p271, %p272
      %p274 = pneg %p273
      // Predicated region
      $region37: #{tpu_custom_call.1} parent=5 // pred_check
        _
      $region38: #{tpu_custom_call.1} parent=5 // pred_check_branch
        %276 = sbr.rel (%p273) target = $region40
      $region39: #{tpu_custom_call.1} parent=5 // pred_region
        %s277 = ssub.s32 %s19, 1
        %s278 = sand.u32 %s44, 1
        %s279 = scalar_lea.sflag [#allocation4], %s278
        %s280 = sand.u32 %s44, 1
        %s281 = smul.addr %s280, 4
        %s282 = scalar_lea.vmem [#allocation3], %s281
        // Predicated region
        $region41: #{tpu_custom_call.1} parent=39 // pred_check
          %p283 = pneg %p57
        $region42: #{tpu_custom_call.1} parent=39 // pred_check_branch
          %285 = sbr.rel (%p283) target = $region44
        $region43: #{tpu_custom_call.1} parent=39 // pred_region
          %287 = dma.done %s279, 64
        $region44: #{tpu_custom_call.1} parent=39 // pred_fallthru
          _
        // Predicated region
        $region45: #{tpu_custom_call.1} parent=39 // pred_check
          %p288 = pneg %p83
        $region46: #{tpu_custom_call.1} parent=39 // pred_check_branch
          %290 = sbr.rel (%p288) target = $region48
        $region47: #{tpu_custom_call.1} parent=39 // pred_region
          %292 = dma.done [#allocation7], 4096
        $region48: #{tpu_custom_call.1} parent=39 // pred_fallthru
          _
        // Predicated region
        $region49: #{tpu_custom_call.1} parent=39 // pred_check
          %p293 = pneg %p109
        $region50: #{tpu_custom_call.1} parent=39 // pred_check_branch
          %295 = sbr.rel (%p293) target = $region52
        $region51: #{tpu_custom_call.1} parent=39 // pred_region
          %297 = dma.done [#allocation7], 64
        $region52: #{tpu_custom_call.1} parent=39 // pred_fallthru
          _
        // Predicated region
        $region53: #{tpu_custom_call.1} parent=39 // pred_check
          %p298 = pneg %p135
        $region54: #{tpu_custom_call.1} parent=39 // pred_check_branch
          %300 = sbr.rel (%p298) target = $region56
        $region55: #{tpu_custom_call.1} parent=39 // pred_region
          %302 = dma.done [#allocation10], 4096
        $region56: #{tpu_custom_call.1} parent=39 // pred_fallthru
          _
        %s303 = sand.u32 %s44, 1
        %s304 = scalar_lea.sflag [#allocation4], %s303
        %s305 = sand.u32 %s44, 1
        %s306 = smul.addr %s305, 4
        %s307 = scalar_lea.vmem [#allocation3], %s306
        %p308 = pneg %p57
        %p309 = pneg %p54
        %p310 = pneg %p83
        %p311 = pneg %p80
        %p312 = pneg %p109
        %p313 = pneg %p106
        %p314 = pneg %p135
        %p315 = pneg %p132
        %p316 = pneg %p156
        %p317 = pneg %p153
        %p318 = pneg %p182
        %p319 = pneg %p179
        %s320 = sand.u32 %s169, 1
        %s321 = scalar_lea.sflag [#allocation5], %s320
        %s322 = sand.u32 %s169, 1
        %s323 = smul.addr %s322, 4
        %s324 = scalar_lea.vmem [#allocation11], %s323
        %s325 = smul.u32 4, %s29
        %s326 = smul.u32 4, %s29
        %s327 = smul.u32 64, %s29
        %p328 = scmp.eq.s32.totalorder %s29, 0
        // Predicated region
        $region57: #{tpu_custom_call.1} parent=39 // pred_check
          %p329 = pneg %p328
        $region58: #{tpu_custom_call.1} parent=39 // pred_check_branch
          %331 = sbr.rel (%p329) target = $region60
        $region59: #{tpu_custom_call.1} parent=39 // pred_region
          %v332 = vld [vmem:[%s4] sm:$0x1]
          %v334 = vperm.slane %v332, 0
          %336 = vst [vmem:[#allocation2] sm:$0xff] %v334
        $region60: #{tpu_custom_call.1} parent=39 // pred_fallthru
          _
        %v337 = vld [vmem:[%s282] sm:$0xf]
        %v338 = vld [vmem:[#allocation6] sm:$0xff]
        %v339 = vld [vmem:[#allocation6 + $0x8] sm:$0xff]
        %v340 = vld [vmem:[#allocation6 + $0x10] sm:$0xff]
        %v341 = vld [vmem:[#allocation6 + $0x18] sm:$0xff]
        %v342 = vld [vmem:[#allocation6 + $0x20] sm:$0xff]
        %v343 = vld [vmem:[#allocation6 + $0x28] sm:$0xff]
        %v344 = vld [vmem:[#allocation6 + $0x30] sm:$0xff]
        %v345 = vld [vmem:[#allocation6 + $0x38] sm:$0xff]
        %v346 = vld [vmem:[#allocation6 + $0x40] sm:$0xff]
        %v347 = vld [vmem:[#allocation6 + $0x48] sm:$0xff]
        %v348 = vld [vmem:[#allocation6 + $0x50] sm:$0xff]
        %v349 = vld [vmem:[#allocation6 + $0x58] sm:$0xff]
        %v350 = vld [vmem:[#allocation6 + $0x60] sm:$0xff]
        %v351 = vld [vmem:[#allocation6 + $0x68] sm:$0xff]
        %v352 = vld [vmem:[#allocation6 + $0x70] sm:$0xff]
        %v353 = vld [vmem:[#allocation6 + $0x78] sm:$0xff]
        %v354 = vld [vmem:[#allocation6 + $0x80] sm:$0xff]
        %v355 = vld [vmem:[#allocation6 + $0x88] sm:$0xff]
        %v356 = vld [vmem:[#allocation6 + $0x90] sm:$0xff]
        %v357 = vld [vmem:[#allocation6 + $0x98] sm:$0xff]
        %v358 = vld [vmem:[#allocation6 + $0xa0] sm:$0xff]
        %v359 = vld [vmem:[#allocation6 + $0xa8] sm:$0xff]
        %v360 = vld [vmem:[#allocation6 + $0xb0] sm:$0xff]
        %v361 = vld [vmem:[#allocation6 + $0xb8] sm:$0xff]
        %v362 = vld [vmem:[#allocation6 + $0xc0] sm:$0xff]
        %v363 = vld [vmem:[#allocation6 + $0xc8] sm:$0xff]
        %v364 = vld [vmem:[#allocation6 + $0xd0] sm:$0xff]
        %v365 = vld [vmem:[#allocation6 + $0xd8] sm:$0xff]
        %v366 = vld [vmem:[#allocation6 + $0xe0] sm:$0xff]
        %v367 = vld [vmem:[#allocation6 + $0xe8] sm:$0xff]
        %v368 = vld [vmem:[#allocation6 + $0xf0] sm:$0xff]
        %v369 = vld [vmem:[#allocation6 + $0xf8] sm:$0xff]
        %v370 = vld [vmem:[#allocation8] sm:$0xf]
        %v372 = vperm.slane %v370, 0
        %v373 = vperm.slane %v370, 1
        %v374 = vperm.slane %v370, 2
        %v375 = vperm.slane %v370, 3
        %v412 = vunpack.c.l.b16 %v338
        %v413 = vunpack.c.h.b16 %v338
        %v414 = vunpack.c.l.b16 %v339
        %v415 = vunpack.c.h.b16 %v339
        %v416 = vunpack.c.l.b16 %v340
        %v417 = vunpack.c.h.b16 %v340
        %v418 = vunpack.c.l.b16 %v341
        %v419 = vunpack.c.h.b16 %v341
        %v420 = vunpack.c.l.b16 %v342
        %v421 = vunpack.c.h.b16 %v342
        %v422 = vunpack.c.l.b16 %v343
        %v423 = vunpack.c.h.b16 %v343
        %v424 = vunpack.c.l.b16 %v344
        %v425 = vunpack.c.h.b16 %v344
        %v426 = vunpack.c.l.b16 %v345
        %v427 = vunpack.c.h.b16 %v345
        %v428 = vunpack.c.l.b16 %v346
        %v429 = vunpack.c.h.b16 %v346
        %v430 = vunpack.c.l.b16 %v347
        %v431 = vunpack.c.h.b16 %v347
        %v432 = vunpack.c.l.b16 %v348
        %v433 = vunpack.c.h.b16 %v348
        %v434 = vunpack.c.l.b16 %v349
        %v435 = vunpack.c.h.b16 %v349
        %v436 = vunpack.c.l.b16 %v350
        %v437 = vunpack.c.h.b16 %v350
        %v438 = vunpack.c.l.b16 %v351
        %v439 = vunpack.c.h.b16 %v351
        %v440 = vunpack.c.l.b16 %v352
        %v441 = vunpack.c.h.b16 %v352
        %v442 = vunpack.c.l.b16 %v353
        %v443 = vunpack.c.h.b16 %v353
        %v444 = vunpack.c.l.b16 %v354
        %v445 = vunpack.c.h.b16 %v354
        %v446 = vunpack.c.l.b16 %v355
        %v447 = vunpack.c.h.b16 %v355
        %v448 = vunpack.c.l.b16 %v356
        %v449 = vunpack.c.h.b16 %v356
        %v450 = vunpack.c.l.b16 %v357
        %v451 = vunpack.c.h.b16 %v357
        %v452 = vunpack.c.l.b16 %v358
        %v453 = vunpack.c.h.b16 %v358
        %v454 = vunpack.c.l.b16 %v359
        %v455 = vunpack.c.h.b16 %v359
        %v456 = vunpack.c.l.b16 %v360
        %v457 = vunpack.c.h.b16 %v360
        %v458 = vunpack.c.l.b16 %v361
        %v459 = vunpack.c.h.b16 %v361
        %v460 = vunpack.c.l.b16 %v362
        %v461 = vunpack.c.h.b16 %v362
        %v462 = vunpack.c.l.b16 %v363
        %v463 = vunpack.c.h.b16 %v363
        %v464 = vunpack.c.l.b16 %v364
        %v465 = vunpack.c.h.b16 %v364
        %v466 = vunpack.c.l.b16 %v365
        %v467 = vunpack.c.h.b16 %v365
        %v468 = vunpack.c.l.b16 %v366
        %v469 = vunpack.c.h.b16 %v366
        %v470 = vunpack.c.l.b16 %v367
        %v471 = vunpack.c.h.b16 %v367
        %v472 = vunpack.c.l.b16 %v368
        %v473 = vunpack.c.h.b16 %v368
        %v474 = vunpack.c.l.b16 %v369
        %v475 = vunpack.c.h.b16 %v369
        %v476 = vpack.c.b16 %v416, %v412
        %v477 = vpack.c.b16 %v417, %v413
        %v478 = vpack.c.b16 %v418, %v414
        %v479 = vpack.c.b16 %v419, %v415
        %v480 = vpack.c.b16 %v424, %v420
        %v481 = vpack.c.b16 %v425, %v421
        %v482 = vpack.c.b16 %v426, %v422
        %v483 = vpack.c.b16 %v427, %v423
        %v484 = vpack.c.b16 %v432, %v428
        %v485 = vpack.c.b16 %v433, %v429
        %v486 = vpack.c.b16 %v434, %v430
        %v487 = vpack.c.b16 %v435, %v431
        %v488 = vpack.c.b16 %v440, %v436
        %v489 = vpack.c.b16 %v441, %v437
        %v490 = vpack.c.b16 %v442, %v438
        %v491 = vpack.c.b16 %v443, %v439
        %v492 = vpack.c.b16 %v448, %v444
        %v493 = vpack.c.b16 %v449, %v445
        %v494 = vpack.c.b16 %v450, %v446
        %v495 = vpack.c.b16 %v451, %v447
        %v496 = vpack.c.b16 %v456, %v452
        %v497 = vpack.c.b16 %v457, %v453
        %v498 = vpack.c.b16 %v458, %v454
        %v499 = vpack.c.b16 %v459, %v455
        %v500 = vpack.c.b16 %v464, %v460
        %v501 = vpack.c.b16 %v465, %v461
        %v502 = vpack.c.b16 %v466, %v462
        %v503 = vpack.c.b16 %v467, %v463
        %v504 = vpack.c.b16 %v472, %v468
        %v505 = vpack.c.b16 %v473, %v469
        %v506 = vpack.c.b16 %v474, %v470
        %v507 = vpack.c.b16 %v475, %v471
        %540 = vmatpush.bf16.msra.mxu0 %v504
        %541 = vmatpush.bf16.msra.mxu0 %v500
        %542 = vmatpush.bf16.msra.mxu0 %v496
        %543 = vmatpush.bf16.msra.mxu0 %v492
        %544 = vmatpush.bf16.msra.mxu0 %v488
        %545 = vmatpush.bf16.msra.mxu0 %v484
        %546 = vmatpush.bf16.msra.mxu0 %v480
        %547 = vmatpush.bf16.msra.mxu0 %v476
        %548 = vmatmul.bf16.gmra.mxu0 %v337
        %v549 = vpop.f32.mrf.mxu0
        %v550 = vadd.f32 %v372, %v549
        %v551 = vpop.f32.mrf.mxu0
        %552 = vdwg.mxu0
        %553 = vmatpush.bf16.msra.mxu0 %v505
        %554 = vmatpush.bf16.msra.mxu0 %v501
        %555 = vmatpush.bf16.msra.mxu0 %v497
        %556 = vmatpush.bf16.msra.mxu0 %v493
        %557 = vmatpush.bf16.msra.mxu0 %v489
        %558 = vmatpush.bf16.msra.mxu0 %v485
        %559 = vmatpush.bf16.msra.mxu0 %v481
        %560 = vmatpush.bf16.msra.mxu0 %v477
        %561 = vmatmul.bf16.gmra.mxu0 %v337
        %v562 = vpop.f32.mrf.mxu0
        %v563 = vadd.f32 %v373, %v562
        %v564 = vpop.f32.mrf.mxu0
        %565 = vdwg.mxu0
        %566 = vmatpush.bf16.msra.mxu0 %v506
        %567 = vmatpush.bf16.msra.mxu0 %v502
        %568 = vmatpush.bf16.msra.mxu0 %v498
        %569 = vmatpush.bf16.msra.mxu0 %v494
        %570 = vmatpush.bf16.msra.mxu0 %v490
        %571 = vmatpush.bf16.msra.mxu0 %v486
        %572 = vmatpush.bf16.msra.mxu0 %v482
        %573 = vmatpush.bf16.msra.mxu0 %v478
        %574 = vmatmul.bf16.gmra.mxu0 %v337
        %v575 = vpop.f32.mrf.mxu0
        %v576 = vadd.f32 %v374, %v575
        %v577 = vpop.f32.mrf.mxu0
        %578 = vdwg.mxu0
        %579 = vmatpush.bf16.msra.mxu0 %v507
        %580 = vmatpush.bf16.msra.mxu0 %v503
        %581 = vmatpush.bf16.msra.mxu0 %v499
        %582 = vmatpush.bf16.msra.mxu0 %v495
        %583 = vmatpush.bf16.msra.mxu0 %v491
        %584 = vmatpush.bf16.msra.mxu0 %v487
        %585 = vmatpush.bf16.msra.mxu0 %v483
        %586 = vmatpush.bf16.msra.mxu0 %v479
        %587 = vmatmul.bf16.gmra.mxu0 %v337
        %v588 = vpop.f32.mrf.mxu0
        %v589 = vadd.f32 %v375, %v588
        %v590 = vpop.f32.mrf.mxu0
        %591 = vdwg.mxu0
        %v592 = vmul.f32 %v550, %v550
        %v593 = vmul.f32 %v563, %v563
        %v594 = vmul.f32 %v576, %v576
        %v595 = vmul.f32 %v589, %v589
        %v596 = vmul.f32 %v592, 0.035677407
        %v597 = vmul.f32 %v593, 0.035677407
        %v598 = vmul.f32 %v594, 0.035677407
        %v599 = vmul.f32 %v595, 0.035677407
        %v600 = vadd.f32 %v596, 0.7978846
        %v601 = vadd.f32 %v597, 0.7978846
        %v602 = vadd.f32 %v598, 0.7978846
        %v603 = vadd.f32 %v599, 0.7978846
        %v604 = vmul.f32 %v550, %v600
        %v605 = vmul.f32 %v563, %v601
        %v606 = vmul.f32 %v576, %v602
        %v607 = vmul.f32 %v589, %v603
        %v608 = vmul.f32 %v550, 0.5
        %v609 = vmul.f32 %v563, 0.5
        %v610 = vmul.f32 %v576, 0.5
        %v611 = vmul.f32 %v589, 0.5
        %v612 = vtanh.pop %v604
        %v613 = vtanh.pop %v605
        %v614 = vtanh.pop %v606
        %v615 = vtanh.pop %v607
        %v616 = vadd.f32 %v612, 1.0
        %v617 = vadd.f32 %v613, 1.0
        %v618 = vadd.f32 %v614, 1.0
        %v619 = vadd.f32 %v615, 1.0
        %v620 = vmul.f32 %v608, %v616
        %v621 = vmul.f32 %v609, %v617
        %v622 = vmul.f32 %v610, %v618
        %v623 = vmul.f32 %v611, %v619
        %v624 = vld [vmem:[#allocation2] sm:$0xff]
        %v625 = vpack.c.bf16 %v620, %v620
        %v626 = vpack.c.bf16 %v621, %v621
        %v627 = vpack.c.bf16 %v622, %v622
        %v628 = vpack.c.bf16 %v623, %v623
        %v629 = vld [vmem:[#allocation9] sm:$0xf]
        %v630 = vld [vmem:[#allocation9 + $0x4] sm:$0xf]
        %v631 = vld [vmem:[#allocation9 + $0x8] sm:$0xf]
        %v632 = vld [vmem:[#allocation9 + $0xc] sm:$0xf]
        %v633 = vld [vmem:[#allocation9 + $0x10] sm:$0xf]
        %v634 = vld [vmem:[#allocation9 + $0x14] sm:$0xf]
        %v635 = vld [vmem:[#allocation9 + $0x18] sm:$0xf]
        %v636 = vld [vmem:[#allocation9 + $0x1c] sm:$0xf]
        %v637 = vld [vmem:[#allocation9 + $0x20] sm:$0xf]
        %v638 = vld [vmem:[#allocation9 + $0x24] sm:$0xf]
        %v639 = vld [vmem:[#allocation9 + $0x28] sm:$0xf]
        %v640 = vld [vmem:[#allocation9 + $0x2c] sm:$0xf]
        %v641 = vld [vmem:[#allocation9 + $0x30] sm:$0xf]
        %v642 = vld [vmem:[#allocation9 + $0x34] sm:$0xf]
        %v643 = vld [vmem:[#allocation9 + $0x38] sm:$0xf]
        %v644 = vld [vmem:[#allocation9 + $0x3c] sm:$0xf]
        %v645 = vld [vmem:[#allocation9 + $0x40] sm:$0xf]
        %v646 = vld [vmem:[#allocation9 + $0x44] sm:$0xf]
        %v647 = vld [vmem:[#allocation9 + $0x48] sm:$0xf]
        %v648 = vld [vmem:[#allocation9 + $0x4c] sm:$0xf]
        %v649 = vld [vmem:[#allocation9 + $0x50] sm:$0xf]
        %v650 = vld [vmem:[#allocation9 + $0x54] sm:$0xf]
        %v651 = vld [vmem:[#allocation9 + $0x58] sm:$0xf]
        %v652 = vld [vmem:[#allocation9 + $0x5c] sm:$0xf]
        %v653 = vld [vmem:[#allocation9 + $0x60] sm:$0xf]
        %v654 = vld [vmem:[#allocation9 + $0x64] sm:$0xf]
        %v655 = vld [vmem:[#allocation9 + $0x68] sm:$0xf]
        %v656 = vld [vmem:[#allocation9 + $0x6c] sm:$0xf]
        %v657 = vld [vmem:[#allocation9 + $0x70] sm:$0xf]
        %v658 = vld [vmem:[#allocation9 + $0x74] sm:$0xf]
        %v659 = vld [vmem:[#allocation9 + $0x78] sm:$0xf]
        %v660 = vld [vmem:[#allocation9 + $0x7c] sm:$0xf]
        %v661 = vld [vmem:[#allocation9 + $0x80] sm:$0xf]
        %v662 = vld [vmem:[#allocation9 + $0x84] sm:$0xf]
        %v663 = vld [vmem:[#allocation9 + $0x88] sm:$0xf]
        %v664 = vld [vmem:[#allocation9 + $0x8c] sm:$0xf]
        %v665 = vld [vmem:[#allocation9 + $0x90] sm:$0xf]
        %v666 = vld [vmem:[#allocation9 + $0x94] sm:$0xf]
        %v667 = vld [vmem:[#allocation9 + $0x98] sm:$0xf]
        %v668 = vld [vmem:[#allocation9 + $0x9c] sm:$0xf]
        %v669 = vld [vmem:[#allocation9 + $0xa0] sm:$0xf]
        %v670 = vld [vmem:[#allocation9 + $0xa4] sm:$0xf]
        %v671 = vld [vmem:[#allocation9 + $0xa8] sm:$0xf]
        %v672 = vld [vmem:[#allocation9 + $0xac] sm:$0xf]
        %v673 = vld [vmem:[#allocation9 + $0xb0] sm:$0xf]
        %v674 = vld [vmem:[#allocation9 + $0xb4] sm:$0xf]
        %v675 = vld [vmem:[#allocation9 + $0xb8] sm:$0xf]
        %v676 = vld [vmem:[#allocation9 + $0xbc] sm:$0xf]
        %v677 = vld [vmem:[#allocation9 + $0xc0] sm:$0xf]
        %v678 = vld [vmem:[#allocation9 + $0xc4] sm:$0xf]
        %v679 = vld [vmem:[#allocation9 + $0xc8] sm:$0xf]
        %v680 = vld [vmem:[#allocation9 + $0xcc] sm:$0xf]
        %v681 = vld [vmem:[#allocation9 + $0xd0] sm:$0xf]
        %v682 = vld [vmem:[#allocation9 + $0xd4] sm:$0xf]
        %v683 = vld [vmem:[#allocation9 + $0xd8] sm:$0xf]
        %v684 = vld [vmem:[#allocation9 + $0xdc] sm:$0xf]
        %v685 = vld [vmem:[#allocation9 + $0xe0] sm:$0xf]
        %v686 = vld [vmem:[#allocation9 + $0xe4] sm:$0xf]
        %v687 = vld [vmem:[#allocation9 + $0xe8] sm:$0xf]
        %v688 = vld [vmem:[#allocation9 + $0xec] sm:$0xf]
        %v689 = vld [vmem:[#allocation9 + $0xf0] sm:$0xf]
        %v690 = vld [vmem:[#allocation9 + $0xf4] sm:$0xf]
        %v691 = vld [vmem:[#allocation9 + $0xf8] sm:$0xf]
        %v692 = vld [vmem:[#allocation9 + $0xfc] sm:$0xf]
        %v757 = vunpack.c.l.b16 %v629
        %v758 = vunpack.c.l.b16 %v630
        %v759 = vunpack.c.l.b16 %v631
        %v760 = vunpack.c.l.b16 %v632
        %v761 = vunpack.c.l.b16 %v633
        %v762 = vunpack.c.l.b16 %v634
        %v763 = vunpack.c.l.b16 %v635
        %v764 = vunpack.c.l.b16 %v636
        %v765 = vunpack.c.l.b16 %v637
        %v766 = vunpack.c.l.b16 %v638
        %v767 = vunpack.c.l.b16 %v639
        %v768 = vunpack.c.l.b16 %v640
        %v769 = vunpack.c.l.b16 %v641
        %v770 = vunpack.c.l.b16 %v642
        %v771 = vunpack.c.l.b16 %v643
        %v772 = vunpack.c.l.b16 %v644
        %v773 = vunpack.c.l.b16 %v645
        %v774 = vunpack.c.l.b16 %v646
        %v775 = vunpack.c.l.b16 %v647
        %v776 = vunpack.c.l.b16 %v648
        %v777 = vunpack.c.l.b16 %v649
        %v778 = vunpack.c.l.b16 %v650
        %v779 = vunpack.c.l.b16 %v651
        %v780 = vunpack.c.l.b16 %v652
        %v781 = vunpack.c.l.b16 %v653
        %v782 = vunpack.c.l.b16 %v654
        %v783 = vunpack.c.l.b16 %v655
        %v784 = vunpack.c.l.b16 %v656
        %v785 = vunpack.c.l.b16 %v657
        %v786 = vunpack.c.l.b16 %v658
        %v787 = vunpack.c.l.b16 %v659
        %v788 = vunpack.c.l.b16 %v660
        %v789 = vunpack.c.l.b16 %v661
        %v790 = vunpack.c.l.b16 %v662
        %v791 = vunpack.c.l.b16 %v663
        %v792 = vunpack.c.l.b16 %v664
        %v793 = vunpack.c.l.b16 %v665
        %v794 = vunpack.c.l.b16 %v666
        %v795 = vunpack.c.l.b16 %v667
        %v796 = vunpack.c.l.b16 %v668
        %v797 = vunpack.c.l.b16 %v669
        %v798 = vunpack.c.l.b16 %v670
        %v799 = vunpack.c.l.b16 %v671
        %v800 = vunpack.c.l.b16 %v672
        %v801 = vunpack.c.l.b16 %v673
        %v802 = vunpack.c.l.b16 %v674
        %v803 = vunpack.c.l.b16 %v675
        %v804 = vunpack.c.l.b16 %v676
        %v805 = vunpack.c.l.b16 %v677
        %v806 = vunpack.c.l.b16 %v678
        %v807 = vunpack.c.l.b16 %v679
        %v808 = vunpack.c.l.b16 %v680
        %v809 = vunpack.c.l.b16 %v681
        %v810 = vunpack.c.l.b16 %v682
        %v811 = vunpack.c.l.b16 %v683
        %v812 = vunpack.c.l.b16 %v684
        %v813 = vunpack.c.l.b16 %v685
        %v814 = vunpack.c.l.b16 %v686
        %v815 = vunpack.c.l.b16 %v687
        %v816 = vunpack.c.l.b16 %v688
        %v817 = vunpack.c.l.b16 %v689
        %v818 = vunpack.c.l.b16 %v690
        %v819 = vunpack.c.l.b16 %v691
        %v820 = vunpack.c.l.b16 %v692
        %v821 = vpack.c.b16 %v758, %v757
        %v822 = vpack.c.b16 %v760, %v759
        %v823 = vpack.c.b16 %v762, %v761
        %v824 = vpack.c.b16 %v764, %v763
        %v825 = vpack.c.b16 %v766, %v765
        %v826 = vpack.c.b16 %v768, %v767
        %v827 = vpack.c.b16 %v770, %v769
        %v828 = vpack.c.b16 %v772, %v771
        %v829 = vpack.c.b16 %v774, %v773
        %v830 = vpack.c.b16 %v776, %v775
        %v831 = vpack.c.b16 %v778, %v777
        %v832 = vpack.c.b16 %v780, %v779
        %v833 = vpack.c.b16 %v782, %v781
        %v834 = vpack.c.b16 %v784, %v783
        %v835 = vpack.c.b16 %v786, %v785
        %v836 = vpack.c.b16 %v788, %v787
        %v837 = vpack.c.b16 %v790, %v789
        %v838 = vpack.c.b16 %v792, %v791
        %v839 = vpack.c.b16 %v794, %v793
        %v840 = vpack.c.b16 %v796, %v795
        %v841 = vpack.c.b16 %v798, %v797
        %v842 = vpack.c.b16 %v800, %v799
        %v843 = vpack.c.b16 %v802, %v801
        %v844 = vpack.c.b16 %v804, %v803
        %v845 = vpack.c.b16 %v806, %v805
        %v846 = vpack.c.b16 %v808, %v807
        %v847 = vpack.c.b16 %v810, %v809
        %v848 = vpack.c.b16 %v812, %v811
        %v849 = vpack.c.b16 %v814, %v813
        %v850 = vpack.c.b16 %v816, %v815
        %v851 = vpack.c.b16 %v818, %v817
        %v852 = vpack.c.b16 %v820, %v819
        %885 = vmatpush.bf16.msra.mxu0 %v828
        %886 = vmatpush.bf16.msra.mxu0 %v827
        %887 = vmatpush.bf16.msra.mxu0 %v826
        %888 = vmatpush.bf16.msra.mxu0 %v825
        %889 = vmatpush.bf16.msra.mxu0 %v824
        %890 = vmatpush.bf16.msra.mxu0 %v823
        %891 = vmatpush.bf16.msra.mxu0 %v822
        %892 = vmatpush.bf16.msra.mxu0 %v821
        %893 = vmatmul.bf16.gmra.mxu0 %v625
        %v894 = vpop.f32.mrf.mxu0
        %v895 = vadd.f32 0.0, %v894
        %v896 = vpop.f32.mrf.mxu0
        %897 = vdwg.mxu0
        %898 = vmatpush.bf16.msra.mxu0 %v836
        %899 = vmatpush.bf16.msra.mxu0 %v835
        %900 = vmatpush.bf16.msra.mxu0 %v834
        %901 = vmatpush.bf16.msra.mxu0 %v833
        %902 = vmatpush.bf16.msra.mxu0 %v832
        %903 = vmatpush.bf16.msra.mxu0 %v831
        %904 = vmatpush.bf16.msra.mxu0 %v830
        %905 = vmatpush.bf16.msra.mxu0 %v829
        %906 = vmatmul.bf16.gmra.mxu0 %v626
        %v907 = vpop.f32.mrf.mxu0
        %v908 = vadd.f32 %v895, %v907
        %v909 = vpop.f32.mrf.mxu0
        %910 = vdwg.mxu0
        %911 = vmatpush.bf16.msra.mxu0 %v844
        %912 = vmatpush.bf16.msra.mxu0 %v843
        %913 = vmatpush.bf16.msra.mxu0 %v842
        %914 = vmatpush.bf16.msra.mxu0 %v841
        %915 = vmatpush.bf16.msra.mxu0 %v840
        %916 = vmatpush.bf16.msra.mxu0 %v839
        %917 = vmatpush.bf16.msra.mxu0 %v838
        %918 = vmatpush.bf16.msra.mxu0 %v837
        %919 = vmatmul.bf16.gmra.mxu0 %v627
        %v920 = vpop.f32.mrf.mxu0
        %v921 = vadd.f32 %v908, %v920
        %v922 = vpop.f32.mrf.mxu0
        %923 = vdwg.mxu0
        %924 = vmatpush.bf16.msra.mxu0 %v852
        %925 = vmatpush.bf16.msra.mxu0 %v851
        %926 = vmatpush.bf16.msra.mxu0 %v850
        %927 = vmatpush.bf16.msra.mxu0 %v849
        %928 = vmatpush.bf16.msra.mxu0 %v848
        %929 = vmatpush.bf16.msra.mxu0 %v847
        %930 = vmatpush.bf16.msra.mxu0 %v846
        %931 = vmatpush.bf16.msra.mxu0 %v845
        %932 = vmatmul.bf16.gmra.mxu0 %v628
        %v933 = vpop.f32.mrf.mxu0
        %v934 = vadd.f32 %v921, %v933
        %v935 = vpop.f32.mrf.mxu0
        %936 = vdwg.mxu0
        %v937 = vadd.f32 %v624, %v934
        %938 = vst [vmem:[#allocation2] sm:$0xff] %v937
        // Predicated region
        $region61: #{tpu_custom_call.1} parent=39 // pred_check
          %p939 = pneg %p328
        $region62: #{tpu_custom_call.1} parent=39 // pred_check_branch
          %941 = sbr.rel (%p939) target = $region64
        $region63: #{tpu_custom_call.1} parent=39 // pred_region
          %v942 = vld [vmem:[#allocation2] sm:$0xff]
          %v943 = vpack.c.bf16 %v942, %v942
          %944 = vst [vmem:[%s324] sm:$0xf] %v943
        $region64: #{tpu_custom_call.1} parent=39 // pred_fallthru
          _
        %s945 = sand.u32 %s169, 1
        %s946 = scalar_lea.sflag [#allocation5], %s945
        %s947 = sand.u32 %s169, 1
        %s948 = smul.addr %s947, 4
        %s949 = scalar_lea.vmem [#allocation11], %s948
        // Predicated region
        $region65: #{tpu_custom_call.1} parent=39 // pred_check
          %p950 = pneg %p179
        $region66: #{tpu_custom_call.1} parent=39 // pred_check_branch
          %952 = sbr.rel (%p950) target = $region68
        $region67: #{tpu_custom_call.1} parent=39 // pred_region
          %954 = vsyncadd %s946, 0
          %s955 = smul.addr %s28, 4
          %s956 = scalar_lea.hbm %s5, %s955
          %s958 = sshll.u32 %s949, 4
          %s959 = int_to_ptr.vmem [resolvable:$true] %s958
          %s960 = sshll.u32 %s956, 4
          %s961 = int_to_ptr.hbm [resolvable:$true] %s960
          %963 = dma.vmem_to_hbm [thread:$0]  %s959, 64, %s961, %s946
        $region68: #{tpu_custom_call.1} parent=39 // pred_fallthru
          _
      $region40: #{tpu_custom_call.1} parent=5 // pred_fallthru
        _
      %p964 = scmp.le.s32.totalorder 2, %s19
      // Predicated region
      $region69: #{tpu_custom_call.1} parent=5 // pred_check
        %p965 = pneg %p964
      $region70: #{tpu_custom_call.1} parent=5 // pred_check_branch
        %967 = sbr.rel (%p965) target = $region72
      $region71: #{tpu_custom_call.1} parent=5 // pred_region
        %s968 = ssub.s32 %s19, 2
        // Predicated region
        $region73: #{tpu_custom_call.1} parent=71 // pred_check
          %p969 = pneg %p185
        $region74: #{tpu_custom_call.1} parent=71 // pred_check_branch
          %971 = sbr.rel (%p969) target = $region76
        $region75: #{tpu_custom_call.1} parent=71 // pred_region
          %s972 = sand.u32 %s170, 1
          %s973 = scalar_lea.sflag [#allocation5], %s972
          %s974 = sand.u32 %s170, 1
          %s975 = smul.addr %s974, 4
          %s976 = scalar_lea.vmem [#allocation11], %s975
          %978 = dma.done %s973, 64
        $region76: #{tpu_custom_call.1} parent=71 // pred_fallthru
          _
      $region72: #{tpu_custom_call.1} parent=5 // pred_fallthru
        _
    $region6: #{tpu_custom_call.1} parent=1 // loop_footer
      %s23 = sadd.s32 1, %s19
    $region7: #{tpu_custom_call.1} parent=1 // loop_footer_branch
      %18 = sbr.rel target = $region3
    $region8: #{tpu_custom_call.1} parent=1 // loop_exit
      _
    %979 = vsyncpa [#allocation4], 1
    %s980 = scalar_lea.sflag [#allocation4], 1
    %981 = vsyncpa %s980, 1
    %982 = vsyncpa [#allocation7], 1
    %983 = vsyncpa [#allocation10], 1
    %984 = vsyncpa [#allocation5], 1
    %s985 = scalar_lea.sflag [#allocation5], 1
    %986 = vsyncpa %s985, 1

</llo_original>
